<compile_context>
chip_gen: v6e
topology: v6e:2x2x1
jax: 0.10.0
libtpu: 0.0.40
codegen_flags: <defaults>
</compile_context>

<pallas_src>
import jax
import jax.numpy as jnp
from jax.experimental import pallas as pl
from jax.experimental.pallas import tpu as pltpu


def cmps_kernel(x_ref, xt_ref, wt_ref, ey_ref, ec_ref, o_ref,
                bfs_ref, bfx_ref, bvs_ref, bvx_ref, anyf_ref):
    # x_ref : (1, TN, d)     candidate tile (row-major, for the exact gather)
    # xt_ref: (1, d, TN)     candidate tile, lane-dense (for the means)
    # wt_ref: (m+1, d)       surrogate weights; row 0 = objective, rows 1..m = constraints
    # ey_ref: (1, S, TN)     objective posterior-sample noise
    # ec_ref: (1, m, S, TN)  constraint posterior-sample noise
    # o_ref : (1, S, d)      selected candidates (written on the last N tile)
    # scratch: running best-score / best-row accumulators for the two score branches
    nt = pl.program_id(1)
    neg_inf = jnp.float32(-jnp.inf)

    @pl.when(nt == 0)
    def _init():
        bfs_ref[...] = jnp.full(bfs_ref.shape, -jnp.inf, bfs_ref.dtype)
        bvs_ref[...] = jnp.full(bvs_ref.shape, -jnp.inf, bvs_ref.dtype)
        bfx_ref[...] = jnp.zeros(bfx_ref.shape, bfx_ref.dtype)
        bvx_ref[...] = jnp.zeros(bvx_ref.shape, bvx_ref.dtype)
        anyf_ref[...] = jnp.zeros(anyf_ref.shape, anyf_ref.dtype)

    x = x_ref[0]                      # (TN, d)  f32
    xt = xt_ref[0]                    # (d, TN)  f32
    w = wt_ref[...]                   # (m+1, d) f32
    d = xt.shape[0]

    # Posterior means, lane-dense: mean[j, n] = sum_d W[d, j] * X[n, d].
    # Unrolled d -> pure VPU broadcast multiply-adds, no tiny MXU matmul / transpose.
    mean = w[:, 0:1] * xt[0:1, :]                      # (m+1, TN)
    for di in range(1, d):
        mean = mean + w[:, di:di + 1] * xt[di:di + 1, :]

    ey = ey_ref[0]                    # (S, TN)
    ec = ec_ref[0]                    # (m, S, TN)
    m = ec.shape[0]

    y_s = mean[0:1, :] + ey                            # (S, TN) objective samples

    # Constraint samples: unrolled over m (static). Feasibility = AND of compares,
    # violation = sum of max(c, 0) -- lane-dense VPU work, no trailing-axis reductions.
    feas = None
    viol = None
    for j in range(m):
        c_j = mean[j + 1:j + 2, :] + ec[j]             # (S, TN)
        f_j = c_j <= 0.0
        v_j = jnp.maximum(c_j, 0.0)
        feas = f_j if feas is None else (feas & f_j)
        viol = v_j if viol is None else (viol + v_j)

    feas_scores = jnp.where(feas, y_s, neg_inf)        # branch A: feasible exists
    viol_scores = -viol                                # branch B: nothing feasible

    s_dim, tn = feas_scores.shape
    ids = jax.lax.broadcasted_iota(jnp.int32, (s_dim, tn), 1)

    def first_max_and_row(scores):
        # First-occurrence argmax (matches jnp.argmax tie order) + exact row gather.
        # Keep max and compare on the same un-reassociated values (exact equality is
        # safe because row_max is an element of scores).
        row_max = jnp.max(scores, axis=-1, keepdims=True)            # (S, 1)
        masked = jnp.where(scores == row_max, ids, jnp.int32(tn))    # (S, TN)
        sel = jnp.min(masked, axis=-1, keepdims=True)                # (S, 1)
        onehot = (ids == sel).astype(jnp.float32)                    # (S, TN)
        # 0/1 weights through the f32 MXU path -> bit-exact gather of X rows.
        row = jnp.dot(onehot, x, preferred_element_type=jnp.float32)  # (S, d)
        return row_max, row

    f_max, f_row = first_max_and_row(feas_scores)
    v_max, v_row = first_max_and_row(viol_scores)

    # Running first-argmax across N tiles: strict '>' keeps the earliest tile/index.
    imp_f = f_max > bfs_ref[...]
    bfs_ref[...] = jnp.where(imp_f, f_max, bfs_ref[...])
    bfx_ref[...] = jnp.where(imp_f, f_row, bfx_ref[...])

    imp_v = v_max > bvs_ref[...]
    bvs_ref[...] = jnp.where(imp_v, v_max, bvs_ref[...])
    bvx_ref[...] = jnp.where(imp_v, v_row, bvx_ref[...])

    # Any feasible candidate in this tile <=> finite feasible-branch max (objective
    # samples are finite here); avoids an extra cross-lane reduce.
    anyf_ref[...] = jnp.maximum(anyf_ref[...], (f_max > neg_inf).astype(jnp.float32))

    @pl.when(nt == pl.num_programs(1) - 1)
    def _finalize():
        use_feas = anyf_ref[...] > 0.0                               # (S, 1)
        o_ref[0] = jnp.where(use_feas, bfx_ref[...], bvx_ref[...]).astype(o_ref.dtype)


def constrained_max_posterior_sampling(X, Wy, Wc, eps_y, eps_c, *, n_tile=128):
    """X: (B,N,d); Wy: (d,1); Wc: (d,m); eps_y: (B,S,N); eps_c: (B,m,S,N) -> (B,S,d)."""
    B, N, d = X.shape
    S = eps_y.shape[1]
    m = Wc.shape[1]
    assert eps_y.shape == (B, S, N)
    assert eps_c.shape == (B, m, S, N)
    assert N % n_tile == 0

    Xt = jnp.swapaxes(X, 1, 2)                          # (B, d, N)  tiny (d*N f32 / batch)
    Wt = jnp.concatenate([Wy, Wc], axis=1).T            # (m+1, d)   row 0 = objective

    grid_spec = pltpu.PrefetchScalarGridSpec(
        num_scalar_prefetch=0,
        grid=(B, N // n_tile),
        in_specs=[
            pl.BlockSpec((1, n_tile, d), lambda b, nt: (b, nt, 0)),        # X
            pl.BlockSpec((1, d, n_tile), lambda b, nt: (b, 0, nt)),        # Xt
            pl.BlockSpec((m + 1, d), lambda b, nt: (0, 0)),                # Wt
            pl.BlockSpec((1, S, n_tile), lambda b, nt: (b, 0, nt)),        # eps_y
            pl.BlockSpec((1, m, S, n_tile), lambda b, nt: (b, 0, 0, nt)),  # eps_c
        ],
        out_specs=pl.BlockSpec((1, S, d), lambda b, nt: (b, 0, 0)),
        scratch_shapes=[
            pltpu.VMEM((S, 1), jnp.float32),   # best feasible-branch score
            pltpu.VMEM((S, d), jnp.float32),   # best feasible-branch X row
            pltpu.VMEM((S, 1), jnp.float32),   # best violation-branch score
            pltpu.VMEM((S, d), jnp.float32),   # best violation-branch X row
            pltpu.VMEM((S, 1), jnp.float32),   # any-feasible flag
        ],
    )
    return pl.pallas_call(
        cmps_kernel,
        out_shape=jax.ShapeDtypeStruct((B, S, d), jnp.float32),
        grid_spec=grid_spec,
        compiler_params=pltpu.CompilerParams(
            dimension_semantics=("parallel", "arbitrary")),
    )(X, Xt, Wt, eps_y, eps_c)


def reference(X, Wy, Wc, eps_y, eps_c):
    """Pure-JAX reference mirroring the PyTorch module logic (kernel input layout)."""
    mean_y = jnp.einsum('bnd,df->bfn', X, Wy)[:, 0]          # (B, N)
    mean_c = jnp.einsum('bnd,dm->bmn', X, Wc)                # (B, m, N)
    Y = mean_y[:, None, :] + eps_y                           # (B, S, N)
    C = mean_c[:, :, None, :] + eps_c                        # (B, m, S, N)
    is_feasible = jnp.all(C <= 0.0, axis=1)                  # (B, S, N)
    has_feasible = jnp.any(is_feasible, axis=-1, keepdims=True)   # (B, S, 1)
    scores = jnp.where(is_feasible, Y, -jnp.inf)
    total_violation = jnp.sum(jnp.maximum(C, 0.0), axis=1)   # (B, S, N)
    scores = jnp.where(has_feasible, scores, -total_violation)
    idx = jnp.argmax(scores, axis=-1)                        # (B, S) first max on ties
    return jax.vmap(lambda xb, ib: xb[ib])(X, idx)           # (B, S, d)


if __name__ == "__main__":
    B, N, d = 2, 256, 8          # batch x num_candidates x dim
    S, m = 4, 2                  # num_samples, num_constraints
    N_TILE = 128                 # 2 candidate tiles -> exercises the running accumulators

    key = jax.random.PRNGKey(0)
    kx, kwy, kwc, key_y, key_c = jax.random.split(key, 5)

    X = jax.random.uniform(kx, (B, N, d), dtype=jnp.float32)       # candidates in [0,1]^d
    Wy = jax.random.normal(kwy, (d, 1), dtype=jnp.float32)         # objective surrogate
    Wc = jax.random.normal(kwc, (d, m), dtype=jnp.float32)         # constraint surrogate

    # Posterior-sample noise generated directly in the kernel's lane-dense layout
    # (candidate axis last) to avoid a host-side relayout of the largest tensors;
    # i.i.d. noise, so this is semantically equivalent to torch's (S, B, N, .) layout.
    eps_y = 0.1 * jax.random.normal(key_y, (B, S, N), dtype=jnp.float32)
    eps_c = 0.1 * jax.random.normal(key_c, (B, m, S, N), dtype=jnp.float32)
    # Shift constraint 0 of realization s=0 so it has no feasible candidate and the
    # negative-total-violation branch is exercised as well.
    eps_c = eps_c.at[:, 0, 0, :].add(10.0)

    out = constrained_max_posterior_sampling(X, Wy, Wc, eps_y, eps_c, n_tile=N_TILE)
    out = jax.block_until_ready(out)

    ref = reference(X, Wy, Wc, eps_y, eps_c)
    assert out.shape == (B, S, d), out.shape
    assert jnp.allclose(out, ref, atol=1e-5, rtol=1e-5), "mismatch vs reference"
    print("KERNEL_OK")
</pallas_src>

<mosaic_0001>
module attributes {stable_mosaic.version = 11 : i64} {
  func.func @cmps_kernel(%arg0: i32, %arg1: i32, %arg2: memref<1x128x8xf32, #tpu.memory_space<vmem>>, %arg3: memref<1x8x128xf32, #tpu.memory_space<vmem>>, %arg4: memref<3x8xf32, #tpu.memory_space<vmem>>, %arg5: memref<1x4x128xf32, #tpu.memory_space<vmem>>, %arg6: memref<1x2x4x128xf32, #tpu.memory_space<vmem>>, %arg7: memref<1x4x8xf32, #tpu.memory_space<vmem>>, %arg8: memref<4x1xf32, #tpu.memory_space<vmem>>, %arg9: memref<4x8xf32, #tpu.memory_space<vmem>>, %arg10: memref<4x1xf32, #tpu.memory_space<vmem>>, %arg11: memref<4x8xf32, #tpu.memory_space<vmem>>, %arg12: memref<4x1xf32, #tpu.memory_space<vmem>>) attributes {dimension_semantics = [#tpu.dimension_semantics<parallel>, #tpu.dimension_semantics<arbitrary>], iteration_bounds = array<i64: 2, 2>, scalar_prefetch = 0 : i64, scratch_operands = 5 : i64, tpu.core_type = #tpu.core_type<tc>, window_params = [{transform_indices = @transform_0, window_bounds = array<i64: 1, 128, 8>}, {transform_indices = @transform_1, window_bounds = array<i64: 1, 8, 128>}, {pipeline_mode = #tpu.pipeline_mode<synchronous>, transform_indices = @transform_2, window_bounds = array<i64: 3, 8>}, {transform_indices = @transform_3, window_bounds = array<i64: 1, 4, 128>}, {transform_indices = @transform_4, window_bounds = array<i64: 1, 2, 4, 128>}, {transform_indices = @transform_5, window_bounds = array<i64: 1, 4, 8>}]} {
    %c0_i32 = arith.constant 0 : i32
    %0 = arith.cmpi eq, %arg1, %c0_i32 : i32
    %1 = arith.extui %0 : i1 to i32
    %c0_i32_0 = arith.constant 0 : i32
    %2 = arith.cmpi ne, %1, %c0_i32_0 : i32
    scf.if %2 {
      %cst_53 = arith.constant 0xFF800000 : f32
      %143 = vector.broadcast %cst_53 : f32 to vector<4x1xf32>
      %c0_54 = arith.constant 0 : index
      %c0_55 = arith.constant 0 : index
      %144 = vector.load %arg8[%c0_54, %c0_55] : memref<4x1xf32, #tpu.memory_space<vmem>>, vector<4x1xf32>
      tpu.vector_store %arg8[%c0_54, %c0_55], %143 {strides = array<i32>} : memref<4x1xf32, #tpu.memory_space<vmem>>, vector<4x1xf32>,
      %cst_56 = arith.constant 0xFF800000 : f32
      %145 = vector.broadcast %cst_56 : f32 to vector<4x1xf32>
      %c0_57 = arith.constant 0 : index
      %c0_58 = arith.constant 0 : index
      %146 = vector.load %arg10[%c0_57, %c0_58] : memref<4x1xf32, #tpu.memory_space<vmem>>, vector<4x1xf32>
      tpu.vector_store %arg10[%c0_57, %c0_58], %145 {strides = array<i32>} : memref<4x1xf32, #tpu.memory_space<vmem>>, vector<4x1xf32>,
      %cst_59 = arith.constant 0.000000e+00 : f32
      %147 = vector.broadcast %cst_59 : f32 to vector<4x8xf32>
      %c0_60 = arith.constant 0 : index
      %c0_61 = arith.constant 0 : index
      %148 = vector.load %arg9[%c0_60, %c0_61] : memref<4x8xf32, #tpu.memory_space<vmem>>, vector<4x8xf32>
      tpu.vector_store %arg9[%c0_60, %c0_61], %147 {strides = array<i32>} : memref<4x8xf32, #tpu.memory_space<vmem>>, vector<4x8xf32>,
      %cst_62 = arith.constant 0.000000e+00 : f32
      %149 = vector.broadcast %cst_62 : f32 to vector<4x8xf32>
      %c0_63 = arith.constant 0 : index
      %c0_64 = arith.constant 0 : index
      %150 = vector.load %arg11[%c0_63, %c0_64] : memref<4x8xf32, #tpu.memory_space<vmem>>, vector<4x8xf32>
      tpu.vector_store %arg11[%c0_63, %c0_64], %149 {strides = array<i32>} : memref<4x8xf32, #tpu.memory_space<vmem>>, vector<4x8xf32>,
      %cst_65 = arith.constant 0.000000e+00 : f32
      %151 = vector.broadcast %cst_65 : f32 to vector<4x1xf32>
      %c0_66 = arith.constant 0 : index
      %c0_67 = arith.constant 0 : index
      %152 = vector.load %arg12[%c0_66, %c0_67] : memref<4x1xf32, #tpu.memory_space<vmem>>, vector<4x1xf32>
      tpu.vector_store %arg12[%c0_66, %c0_67], %151 {strides = array<i32>} : memref<4x1xf32, #tpu.memory_space<vmem>>, vector<4x1xf32>,
    } else {
    }
    %c0 = arith.constant 0 : index
    %c0_1 = arith.constant 0 : index
    %c0_2 = arith.constant 0 : index
    %3 = vector.load %arg2[%c0, %c0_1, %c0_2] : memref<1x128x8xf32, #tpu.memory_space<vmem>>, vector<1x128x8xf32>
    %4 = vector.shape_cast %3 : vector<1x128x8xf32> to vector<128x8xf32>
    %c0_3 = arith.constant 0 : index
    %c0_4 = arith.constant 0 : index
    %c0_5 = arith.constant 0 : index
    %5 = vector.load %arg3[%c0_3, %c0_4, %c0_5] : memref<1x8x128xf32, #tpu.memory_space<vmem>>, vector<1x8x128xf32>
    %6 = vector.shape_cast %5 : vector<1x8x128xf32> to vector<8x128xf32>
    %c0_6 = arith.constant 0 : index
    %c0_7 = arith.constant 0 : index
    %7 = vector.load %arg4[%c0_6, %c0_7] : memref<3x8xf32, #tpu.memory_space<vmem>>, vector<3x8xf32>
    %8 = vector.extract_strided_slice %7 {offsets = [0, 0], sizes = [3, 1], strides = [1, 1]} : vector<3x8xf32> to vector<3x1xf32>
    %9 = vector.extract_strided_slice %6 {offsets = [0, 0], sizes = [1, 128], strides = [1, 1]} : vector<8x128xf32> to vector<1x128xf32>
    %10 = vector.broadcast %8 : vector<3x1xf32> to vector<3x128xf32>
    %11 = vector.broadcast %9 : vector<1x128xf32> to vector<3x128xf32>
    %12 = arith.mulf %10, %11 : vector<3x128xf32>
    %13 = vector.extract_strided_slice %7 {offsets = [0, 1], sizes = [3, 1], strides = [1, 1]} : vector<3x8xf32> to vector<3x1xf32>
    %14 = vector.extract_strided_slice %6 {offsets = [1, 0], sizes = [1, 128], strides = [1, 1]} : vector<8x128xf32> to vector<1x128xf32>
    %15 = vector.broadcast %13 : vector<3x1xf32> to vector<3x128xf32>
    %16 = vector.broadcast %14 : vector<1x128xf32> to vector<3x128xf32>
    %17 = arith.mulf %15, %16 : vector<3x128xf32>
    %18 = arith.addf %12, %17 : vector<3x128xf32>
    %19 = vector.extract_strided_slice %7 {offsets = [0, 2], sizes = [3, 1], strides = [1, 1]} : vector<3x8xf32> to vector<3x1xf32>
    %20 = vector.extract_strided_slice %6 {offsets = [2, 0], sizes = [1, 128], strides = [1, 1]} : vector<8x128xf32> to vector<1x128xf32>
    %21 = vector.broadcast %19 : vector<3x1xf32> to vector<3x128xf32>
    %22 = vector.broadcast %20 : vector<1x128xf32> to vector<3x128xf32>
    %23 = arith.mulf %21, %22 : vector<3x128xf32>
    %24 = arith.addf %18, %23 : vector<3x128xf32>
    %25 = vector.extract_strided_slice %7 {offsets = [0, 3], sizes = [3, 1], strides = [1, 1]} : vector<3x8xf32> to vector<3x1xf32>
    %26 = vector.extract_strided_slice %6 {offsets = [3, 0], sizes = [1, 128], strides = [1, 1]} : vector<8x128xf32> to vector<1x128xf32>
    %27 = vector.broadcast %25 : vector<3x1xf32> to vector<3x128xf32>
    %28 = vector.broadcast %26 : vector<1x128xf32> to vector<3x128xf32>
    %29 = arith.mulf %27, %28 : vector<3x128xf32>
    %30 = arith.addf %24, %29 : vector<3x128xf32>
    %31 = vector.extract_strided_slice %7 {offsets = [0, 4], sizes = [3, 1], strides = [1, 1]} : vector<3x8xf32> to vector<3x1xf32>
    %32 = vector.extract_strided_slice %6 {offsets = [4, 0], sizes = [1, 128], strides = [1, 1]} : vector<8x128xf32> to vector<1x128xf32>
    %33 = vector.broadcast %31 : vector<3x1xf32> to vector<3x128xf32>
    %34 = vector.broadcast %32 : vector<1x128xf32> to vector<3x128xf32>
    %35 = arith.mulf %33, %34 : vector<3x128xf32>
    %36 = arith.addf %30, %35 : vector<3x128xf32>
    %37 = vector.extract_strided_slice %7 {offsets = [0, 5], sizes = [3, 1], strides = [1, 1]} : vector<3x8xf32> to vector<3x1xf32>
    %38 = vector.extract_strided_slice %6 {offsets = [5, 0], sizes = [1, 128], strides = [1, 1]} : vector<8x128xf32> to vector<1x128xf32>
    %39 = vector.broadcast %37 : vector<3x1xf32> to vector<3x128xf32>
    %40 = vector.broadcast %38 : vector<1x128xf32> to vector<3x128xf32>
    %41 = arith.mulf %39, %40 : vector<3x128xf32>
    %42 = arith.addf %36, %41 : vector<3x128xf32>
    %43 = vector.extract_strided_slice %7 {offsets = [0, 6], sizes = [3, 1], strides = [1, 1]} : vector<3x8xf32> to vector<3x1xf32>
    %44 = vector.extract_strided_slice %6 {offsets = [6, 0], sizes = [1, 128], strides = [1, 1]} : vector<8x128xf32> to vector<1x128xf32>
    %45 = vector.broadcast %43 : vector<3x1xf32> to vector<3x128xf32>
    %46 = vector.broadcast %44 : vector<1x128xf32> to vector<3x128xf32>
    %47 = arith.mulf %45, %46 : vector<3x128xf32>
    %48 = arith.addf %42, %47 : vector<3x128xf32>
    %49 = vector.extract_strided_slice %7 {offsets = [0, 7], sizes = [3, 1], strides = [1, 1]} : vector<3x8xf32> to vector<3x1xf32>
    %50 = vector.extract_strided_slice %6 {offsets = [7, 0], sizes = [1, 128], strides = [1, 1]} : vector<8x128xf32> to vector<1x128xf32>
    %51 = vector.broadcast %49 : vector<3x1xf32> to vector<3x128xf32>
    %52 = vector.broadcast %50 : vector<1x128xf32> to vector<3x128xf32>
    %53 = arith.mulf %51, %52 : vector<3x128xf32>
    %54 = arith.addf %48, %53 : vector<3x128xf32>
    %c0_8 = arith.constant 0 : index
    %c0_9 = arith.constant 0 : index
    %c0_10 = arith.constant 0 : index
    %55 = vector.load %arg5[%c0_8, %c0_9, %c0_10] : memref<1x4x128xf32, #tpu.memory_space<vmem>>, vector<1x4x128xf32>
    %56 = vector.shape_cast %55 : vector<1x4x128xf32> to vector<4x128xf32>
    %c0_11 = arith.constant 0 : index
    %c0_12 = arith.constant 0 : index
    %c0_13 = arith.constant 0 : index
    %c0_14 = arith.constant 0 : index
    %57 = vector.load %arg6[%c0_11, %c0_12, %c0_13, %c0_14] : memref<1x2x4x128xf32, #tpu.memory_space<vmem>>, vector<1x2x4x128xf32>
    %58 = vector.shape_cast %57 : vector<1x2x4x128xf32> to vector<2x4x128xf32>
    %59 = vector.extract_strided_slice %54 {offsets = [0, 0], sizes = [1, 128], strides = [1, 1]} : vector<3x128xf32> to vector<1x128xf32>
    %60 = vector.broadcast %59 : vector<1x128xf32> to vector<4x128xf32>
    %61 = arith.addf %60, %56 : vector<4x128xf32>
    %62 = vector.extract_strided_slice %54 {offsets = [1, 0], sizes = [1, 128], strides = [1, 1]} : vector<3x128xf32> to vector<1x128xf32>
    %63 = vector.extract_strided_slice %58 {offsets = [0, 0, 0], sizes = [1, 4, 128], strides = [1, 1, 1]} : vector<2x4x128xf32> to vector<1x4x128xf32>
    %64 = vector.shape_cast %63 : vector<1x4x128xf32> to vector<4x128xf32>
    %65 = vector.broadcast %62 : vector<1x128xf32> to vector<4x128xf32>
    %66 = arith.addf %65, %64 : vector<4x128xf32>
    %cst = arith.constant 0.000000e+00 : f32
    %67 = vector.broadcast %cst : f32 to vector<4x128xf32>
    %68 = arith.cmpf ole, %66, %67 : vector<4x128xf32>
    %cst_15 = arith.constant 0.000000e+00 : f32
    %69 = vector.broadcast %cst_15 : f32 to vector<4x128xf32>
    %70 = arith.maximumf %66, %69 : vector<4x128xf32>
    %71 = vector.extract_strided_slice %54 {offsets = [2, 0], sizes = [1, 128], strides = [1, 1]} : vector<3x128xf32> to vector<1x128xf32>
    %72 = vector.extract_strided_slice %58 {offsets = [1, 0, 0], sizes = [1, 4, 128], strides = [1, 1, 1]} : vector<2x4x128xf32> to vector<1x4x128xf32>
    %73 = vector.shape_cast %72 : vector<1x4x128xf32> to vector<4x128xf32>
    %74 = vector.broadcast %71 : vector<1x128xf32> to vector<4x128xf32>
    %75 = arith.addf %74, %73 : vector<4x128xf32>
    %cst_16 = arith.constant 0.000000e+00 : f32
    %76 = vector.broadcast %cst_16 : f32 to vector<4x128xf32>
    %77 = arith.cmpf ole, %75, %76 : vector<4x128xf32>
    %cst_17 = arith.constant 0.000000e+00 : f32
    %78 = vector.broadcast %cst_17 : f32 to vector<4x128xf32>
    %79 = arith.maximumf %75, %78 : vector<4x128xf32>
    %80 = arith.andi %68, %77 : vector<4x128xi1>
    %81 = arith.addf %70, %79 : vector<4x128xf32>
    %cst_18 = arith.constant 0xFF800000 : f32
    %82 = vector.broadcast %cst_18 : f32 to vector<4x128xf32>
    %83 = arith.select %80, %61, %82 : vector<4x128xi1>, vector<4x128xf32>
    %cst_19 = arith.constant 0.000000e+00 : f32
    %84 = vector.broadcast %cst_19 : f32 to vector<4x128xf32>
    %85 = arith.subf %84, %81 : vector<4x128xf32>
    %86 = tpu.iota {dimensions = array<i32: 1>} : vector<4x128xi32>
    %cst_20 = arith.constant dense<0xFF800000> : vector<4xf32>
    %87 = vector.multi_reduction <maximumf>, %83, %cst_20 [1] : vector<4x128xf32> to vector<4xf32>
    %88 = vector.shape_cast %87 : vector<4xf32> to vector<4x1xf32>
    %89 = vector.broadcast %88 : vector<4x1xf32> to vector<4x128xf32>
    %90 = arith.cmpf oeq, %83, %89 : vector<4x128xf32>
    %c128_i32 = arith.constant 128 : i32
    %91 = vector.broadcast %c128_i32 : i32 to vector<4x128xi32>
    %92 = arith.select %90, %86, %91 : vector<4x128xi1>, vector<4x128xi32>
    %cst_21 = arith.constant dense<2147483647> : vector<4xi32>
    %93 = vector.multi_reduction <minsi>, %92, %cst_21 [1] : vector<4x128xi32> to vector<4xi32>
    %94 = vector.shape_cast %93 : vector<4xi32> to vector<4x1xi32>
    %95 = vector.broadcast %94 : vector<4x1xi32> to vector<4x128xi32>
    %96 = arith.cmpi eq, %86, %95 : vector<4x128xi32>
    %97 = arith.extui %96 : vector<4x128xi1> to vector<4x128xi32>
    %98 = arith.sitofp %97 : vector<4x128xi32> to vector<4x128xf32>
    %cst_22 = arith.constant dense<0.000000e+00> : vector<4x8xf32>
    %99 = tpu.matmul %98, %4, %cst_22 {dimension_numbers = #tpu.dot_dimension_numbers<[1], [0], [0], [1], [0, 0, 1, 1], [], []>} : vector<4x128xf32>, vector<128x8xf32>, vector<4x8xf32> -> vector<4x8xf32>
    %cst_23 = arith.constant dense<0xFF800000> : vector<4xf32>
    %100 = vector.multi_reduction <maximumf>, %85, %cst_23 [1] : vector<4x128xf32> to vector<4xf32>
    %101 = vector.shape_cast %100 : vector<4xf32> to vector<4x1xf32>
    %102 = vector.broadcast %101 : vector<4x1xf32> to vector<4x128xf32>
    %103 = arith.cmpf oeq, %85, %102 : vector<4x128xf32>
    %c128_i32_24 = arith.constant 128 : i32
    %104 = vector.broadcast %c128_i32_24 : i32 to vector<4x128xi32>
    %105 = arith.select %103, %86, %104 : vector<4x128xi1>, vector<4x128xi32>
    %cst_25 = arith.constant dense<2147483647> : vector<4xi32>
    %106 = vector.multi_reduction <minsi>, %105, %cst_25 [1] : vector<4x128xi32> to vector<4xi32>
    %107 = vector.shape_cast %106 : vector<4xi32> to vector<4x1xi32>
    %108 = vector.broadcast %107 : vector<4x1xi32> to vector<4x128xi32>
    %109 = arith.cmpi eq, %86, %108 : vector<4x128xi32>
    %110 = arith.extui %109 : vector<4x128xi1> to vector<4x128xi32>
    %111 = arith.sitofp %110 : vector<4x128xi32> to vector<4x128xf32>
    %cst_26 = arith.constant dense<0.000000e+00> : vector<4x8xf32>
    %112 = tpu.matmul %111, %4, %cst_26 {dimension_numbers = #tpu.dot_dimension_numbers<[1], [0], [0], [1], [0, 0, 1, 1], [], []>} : vector<4x128xf32>, vector<128x8xf32>, vector<4x8xf32> -> vector<4x8xf32>
    %c0_27 = arith.constant 0 : index
    %c0_28 = arith.constant 0 : index
    %113 = vector.load %arg8[%c0_27, %c0_28] : memref<4x1xf32, #tpu.memory_space<vmem>>, vector<4x1xf32>
    %114 = arith.cmpf ogt, %88, %113 : vector<4x1xf32>
    %c0_29 = arith.constant 0 : index
    %c0_30 = arith.constant 0 : index
    %115 = vector.load %arg8[%c0_29, %c0_30] : memref<4x1xf32, #tpu.memory_space<vmem>>, vector<4x1xf32>
    %116 = arith.select %114, %88, %115 : vector<4x1xi1>, vector<4x1xf32>
    %c0_31 = arith.constant 0 : index
    %c0_32 = arith.constant 0 : index
    %117 = vector.load %arg8[%c0_31, %c0_32] : memref<4x1xf32, #tpu.memory_space<vmem>>, vector<4x1xf32>
    tpu.vector_store %arg8[%c0_31, %c0_32], %116 {strides = array<i32>} : memref<4x1xf32, #tpu.memory_space<vmem>>, vector<4x1xf32>,
    %c0_33 = arith.constant 0 : index
    %c0_34 = arith.constant 0 : index
    %118 = vector.load %arg9[%c0_33, %c0_34] : memref<4x8xf32, #tpu.memory_space<vmem>>, vector<4x8xf32>
    %119 = vector.shape_cast %114 : vector<4x1xi1> to vector<4x1xi1>
    %120 = vector.broadcast %119 : vector<4x1xi1> to vector<4x8xi1>
    %121 = arith.select %120, %99, %118 : vector<4x8xi1>, vector<4x8xf32>
    %c0_35 = arith.constant 0 : index
    %c0_36 = arith.constant 0 : index
    %122 = vector.load %arg9[%c0_35, %c0_36] : memref<4x8xf32, #tpu.memory_space<vmem>>, vector<4x8xf32>
    tpu.vector_store %arg9[%c0_35, %c0_36], %121 {strides = array<i32>} : memref<4x8xf32, #tpu.memory_space<vmem>>, vector<4x8xf32>,
    %c0_37 = arith.constant 0 : index
    %c0_38 = arith.constant 0 : index
    %123 = vector.load %arg10[%c0_37, %c0_38] : memref<4x1xf32, #tpu.memory_space<vmem>>, vector<4x1xf32>
    %124 = arith.cmpf ogt, %101, %123 : vector<4x1xf32>
    %c0_39 = arith.constant 0 : index
    %c0_40 = arith.constant 0 : index
    %125 = vector.load %arg10[%c0_39, %c0_40] : memref<4x1xf32, #tpu.memory_space<vmem>>, vector<4x1xf32>
    %126 = arith.select %124, %101, %125 : vector<4x1xi1>, vector<4x1xf32>
    %c0_41 = arith.constant 0 : index
    %c0_42 = arith.constant 0 : index
    %127 = vector.load %arg10[%c0_41, %c0_42] : memref<4x1xf32, #tpu.memory_space<vmem>>, vector<4x1xf32>
    tpu.vector_store %arg10[%c0_41, %c0_42], %126 {strides = array<i32>} : memref<4x1xf32, #tpu.memory_space<vmem>>, vector<4x1xf32>,
    %c0_43 = arith.constant 0 : index
    %c0_44 = arith.constant 0 : index
    %128 = vector.load %arg11[%c0_43, %c0_44] : memref<4x8xf32, #tpu.memory_space<vmem>>, vector<4x8xf32>
    %129 = vector.shape_cast %124 : vector<4x1xi1> to vector<4x1xi1>
    %130 = vector.broadcast %129 : vector<4x1xi1> to vector<4x8xi1>
    %131 = arith.select %130, %112, %128 : vector<4x8xi1>, vector<4x8xf32>
    %c0_45 = arith.constant 0 : index
    %c0_46 = arith.constant 0 : index
    %132 = vector.load %arg11[%c0_45, %c0_46] : memref<4x8xf32, #tpu.memory_space<vmem>>, vector<4x8xf32>
    tpu.vector_store %arg11[%c0_45, %c0_46], %131 {strides = array<i32>} : memref<4x8xf32, #tpu.memory_space<vmem>>, vector<4x8xf32>,
    %c0_47 = arith.constant 0 : index
    %c0_48 = arith.constant 0 : index
    %133 = vector.load %arg12[%c0_47, %c0_48] : memref<4x1xf32, #tpu.memory_space<vmem>>, vector<4x1xf32>
    %cst_49 = arith.constant 0xFF800000 : f32
    %134 = vector.broadcast %cst_49 : f32 to vector<4x1xf32>
    %135 = arith.cmpf ogt, %88, %134 : vector<4x1xf32>
    %136 = arith.extui %135 : vector<4x1xi1> to vector<4x1xi32>
    %137 = arith.sitofp %136 : vector<4x1xi32> to vector<4x1xf32>
    %138 = arith.maximumf %133, %137 : vector<4x1xf32>
    %c0_50 = arith.constant 0 : index
    %c0_51 = arith.constant 0 : index
    %139 = vector.load %arg12[%c0_50, %c0_51] : memref<4x1xf32, #tpu.memory_space<vmem>>, vector<4x1xf32>
    tpu.vector_store %arg12[%c0_50, %c0_51], %138 {strides = array<i32>} : memref<4x1xf32, #tpu.memory_space<vmem>>, vector<4x1xf32>,
    %c1_i32 = arith.constant 1 : i32
    %140 = arith.cmpi eq, %arg1, %c1_i32 : i32
    %141 = arith.extui %140 : i1 to i32
    %c0_i32_52 = arith.constant 0 : i32
    %142 = arith.cmpi ne, %141, %c0_i32_52 : i32
    scf.if %142 {
      %c0_53 = arith.constant 0 : index
      %c0_54 = arith.constant 0 : index
      %143 = vector.load %arg12[%c0_53, %c0_54] : memref<4x1xf32, #tpu.memory_space<vmem>>, vector<4x1xf32>
      %cst_55 = arith.constant 0.000000e+00 : f32
      %144 = vector.broadcast %cst_55 : f32 to vector<4x1xf32>
      %145 = arith.cmpf ogt, %143, %144 : vector<4x1xf32>
      %c0_56 = arith.constant 0 : index
      %c0_57 = arith.constant 0 : index
      %146 = vector.load %arg9[%c0_56, %c0_57] : memref<4x8xf32, #tpu.memory_space<vmem>>, vector<4x8xf32>
      %c0_58 = arith.constant 0 : index
      %c0_59 = arith.constant 0 : index
      %147 = vector.load %arg11[%c0_58, %c0_59] : memref<4x8xf32, #tpu.memory_space<vmem>>, vector<4x8xf32>
      %148 = vector.shape_cast %145 : vector<4x1xi1> to vector<4x1xi1>
      %149 = vector.broadcast %148 : vector<4x1xi1> to vector<4x8xi1>
      %150 = arith.select %149, %146, %147 : vector<4x8xi1>, vector<4x8xf32>
      %c0_60 = arith.constant 0 : index
      %c0_61 = arith.constant 0 : index
      %c0_62 = arith.constant 0 : index
      %151 = vector.load %arg7[%c0_60, %c0_61, %c0_62] : memref<1x4x8xf32, #tpu.memory_space<vmem>>, vector<1x4x8xf32>
      %152 = vector.shape_cast %151 : vector<1x4x8xf32> to vector<4x8xf32>
      %153 = vector.shape_cast %150 : vector<4x8xf32> to vector<1x4x8xf32>
      tpu.vector_store %arg7[%c0_60, %c0_61, %c0_62], %153 {strides = array<i32>} : memref<1x4x8xf32, #tpu.memory_space<vmem>>, vector<1x4x8xf32>,
    } else {
    }
    return
  }
  func.func @transform_0(%arg0: i32, %arg1: i32) -> (i32, i32, i32) {
    %c0_i32 = arith.constant 0 : i32
    %c0_i32_0 = arith.constant 0 : i32
    return %arg0, %arg1, %c0_i32 : i32, i32, i32
  }
  func.func @transform_1(%arg0: i32, %arg1: i32) -> (i32, i32, i32) {
    %c0_i32 = arith.constant 0 : i32
    %c0_i32_0 = arith.constant 0 : i32
    return %arg0, %c0_i32, %arg1 : i32, i32, i32
  }
  func.func @transform_2(%arg0: i32, %arg1: i32) -> (i32, i32) {
    %c0_i32 = arith.constant 0 : i32
    %c0_i32_0 = arith.constant 0 : i32
    %c0_i32_1 = arith.constant 0 : i32
    return %c0_i32, %c0_i32_0 : i32, i32
  }
  func.func @transform_3(%arg0: i32, %arg1: i32) -> (i32, i32, i32) {
    %c0_i32 = arith.constant 0 : i32
    %c0_i32_0 = arith.constant 0 : i32
    return %arg0, %c0_i32, %arg1 : i32, i32, i32
  }
  func.func @transform_4(%arg0: i32, %arg1: i32) -> (i32, i32, i32, i32) {
    %c0_i32 = arith.constant 0 : i32
    %c0_i32_0 = arith.constant 0 : i32
    %c0_i32_1 = arith.constant 0 : i32
    return %arg0, %c0_i32, %c0_i32_0, %arg1 : i32, i32, i32, i32
  }
  func.func @transform_5(%arg0: i32, %arg1: i32) -> (i32, i32, i32) {
    %c0_i32 = arith.constant 0 : i32
    %c0_i32_0 = arith.constant 0 : i32
    %c0_i32_1 = arith.constant 0 : i32
    return %arg0, %c0_i32, %c0_i32_0 : i32, i32, i32
  }
}

</mosaic_0001>

<llo_original>
// kernel: tpu_custom_call.1
$region0: #{tpu_custom_call.1}
  #allocation0 [shape = 'u32[]', space=smem, size = 0x4, offset = 0x4, fixed_abs, tag = 'smem constant byte address 0x4 - core index']
  #allocation1 [shape = 'u32[144,128]{1,0:T(1,128)}', space=vmem, size = 0x12000, scoped, tag = 'internal scratch']
  #allocation2 [shape = 'f32[4,1]{1,0:T(4,128)}', space=vmem, size = 0x800, scoped, tag = 'scratch operand']
  #allocation3 [shape = 'f32[4,8]{1,0:T(4,128)}', space=vmem, size = 0x800, scoped, tag = 'scratch operand']
  #allocation4 [shape = 'f32[4,1]{1,0:T(4,128)}', space=vmem, size = 0x800, scoped, tag = 'scratch operand']
  #allocation5 [shape = 'f32[4,8]{1,0:T(4,128)}', space=vmem, size = 0x800, scoped, tag = 'scratch operand']
  #allocation6 [shape = 'f32[4,1]{1,0:T(4,128)}', space=vmem, size = 0x800, scoped, tag = 'scratch operand']
  %s0 = inlined_call_operand.vmem [shape: f32[2,256,8], index: 0, kind: input, shape index: {}]
  %s1 = inlined_call_operand.vmem [shape: f32[2,8,256], index: 1, kind: input, shape index: {}]
  %s2 = inlined_call_operand.vmem [shape: f32[3,8], index: 2, kind: input, shape index: {}]
  %s3 = inlined_call_operand.vmem [shape: f32[2,4,256], index: 3, kind: input, shape index: {}]
  %s4 = inlined_call_operand.vmem [shape: f32[2,2,4,256], index: 4, kind: input, shape index: {}]
  %s5 = inlined_call_operand.hbm [shape: f32[2,4,8], index: 5, kind: output, shape index: {}]
  %s6 = sld [smem:[#allocation0]]
  $region102: #{tpu_custom_call.1} parent=0
    _
  %s8 = ssub.s32 1, %s6
  %s9 = scalar_select 0, %s8, %s6
  $region1: #{tpu_custom_call.1} parent=0
    #allocation7 [shape = 'u8[8192]{0}', space=vmem, size = 0x2000, scoped, tag = 'input window, operand 4']
    #allocation8 [shape = 'u8[4096]{0}', space=vmem, size = 0x1000, scoped, tag = 'output window, operand 0']
    #allocation9 [shape = 's32[2]{0}', space=sflag, size = 0x8, scoped, tag = 'scoped memory for tpu_custom_call.1']
    %10 = vsyncpa [#allocation9], 0
    %s11 = scalar_lea.sflag [#allocation9], 1
    %12 = vsyncpa %s11, 0
    loop: start=0, step=1, limit=6
    $region2: #{tpu_custom_call.1} parent=1 // loop_pre_header
      _
    $region3: #{tpu_custom_call.1} parent=1 // loop_header
      %s14 = sphi 0, %s18
      %p15 = scmp.ge.s32.totalorder %s14, 6
      %s21 = sphi 0, %s33
      %s22 = sphi 0, %s29
      %s23 = sphi 0, %s21
      %s24 = sphi 0, %s22
      %s25 = sphi 0, %s23
      %s26 = sphi 0, %s24
      %s38 = sphi 0, %s40
      %s41 = sphi 0, %s38
      %s42 = sphi 0, %s41
      %s58 = sphi 0, %s42
      %s66 = sphi 0, %s68
      %s69 = sphi 0, %s66
      %s70 = sphi 0, %s69
      %s86 = sphi 0, %s70
      %s90 = sphi 0, %s90
      %s92 = sphi 0, %s90
      %s93 = sphi 0, %s92
      %s107 = sphi 0, %s93
      %s115 = sphi 0, %s117
      %s118 = sphi 0, %s115
      %s119 = sphi 0, %s118
      %s135 = sphi 0, %s119
      %s143 = sphi 0, %s145
      %s146 = sphi 0, %s143
      %s147 = sphi 0, %s146
      %s163 = sphi 0, %s147
      %s169 = sphi 0, %s171
      %s172 = sphi 0, %s169
      %s173 = sphi 0, %s172
      %s189 = sphi 0, %s173
    $region4: #{tpu_custom_call.1} parent=1 // loop_header_branch
      %17 = sbr.rel (%p15) target = $region8
    $region5: #{tpu_custom_call.1} parent=1 // loop_body
      %s19 = ssub.s32 %s14, 1
      %s20 = ssub.s32 %s14, 2
      %s27 = sadd.s32 1, %s22
      %p28 = scmp.ge.s32.totalorder %s27, 2
      %s29 = scalar_select %p28, 0, %s27
      %s30 = sadd.s32 1, %s21
      %s31 = scalar_select %p28, %s30, %s21
      %p32 = scmp.ge.s32.totalorder %s31, 2
      %s33 = scalar_select %p32, 0, %s31
      %s34 = ssub.s32 %s21, %s33
      %s35 = ssub.s32 %s22, %s29
      %s36 = sor.u32 %s34, %s35
      %p37 = scmp.eq.s32.totalorder %s36, 0
      %s39 = sadd.s32 %s38, 1
      %s40 = scalar_select %p37, %s38, %s39
      %p43 = pneg %p37
      %p44 = scmp.eq.s32.totalorder %s14, 3
      %p45 = por %p43, %p44
      %p46 = scmp.ne.s32.totalorder %s38, %s41
      %p47 = scmp.eq.s32.totalorder %s14, 0
      %p48 = por %p46, %p47
      %p49 = scmp.ne.s32.totalorder %s38, %s41
      %p50 = scmp.eq.s32.totalorder %s19, 3
      %p51 = por %p49, %p50
      %p52 = scmp.ne.s32.totalorder %s41, %s42
      %p53 = scmp.eq.s32.totalorder %s19, 0
      %p54 = por %p52, %p53
      %p55 = scmp.ne.s32.totalorder %s41, %s42
      %p56 = scmp.eq.s32.totalorder %s20, 3
      %p57 = por %p55, %p56
      %p59 = scmp.ne.s32.totalorder %s42, %s58
      %p60 = scmp.eq.s32.totalorder %s20, 0
      %p61 = por %p59, %p60
      %s62 = ssub.s32 %s21, %s33
      %s63 = ssub.s32 %s22, %s29
      %s64 = sor.u32 %s62, %s63
      %p65 = scmp.eq.s32.totalorder %s64, 0
      %s67 = sadd.s32 %s66, 1
      %s68 = scalar_select %p65, %s66, %s67
      %p71 = pneg %p65
      %p72 = scmp.eq.s32.totalorder %s14, 3
      %p73 = por %p71, %p72
      %p74 = scmp.ne.s32.totalorder %s66, %s69
      %p75 = scmp.eq.s32.totalorder %s14, 0
      %p76 = por %p74, %p75
      %p77 = scmp.ne.s32.totalorder %s66, %s69
      %p78 = scmp.eq.s32.totalorder %s19, 3
      %p79 = por %p77, %p78
      %p80 = scmp.ne.s32.totalorder %s69, %s70
      %p81 = scmp.eq.s32.totalorder %s19, 0
      %p82 = por %p80, %p81
      %p83 = scmp.ne.s32.totalorder %s69, %s70
      %p84 = scmp.eq.s32.totalorder %s20, 3
      %p85 = por %p83, %p84
      %p87 = scmp.ne.s32.totalorder %s70, %s86
      %p88 = scmp.eq.s32.totalorder %s20, 0
      %p89 = por %p87, %p88
      %s91 = sadd.s32 %s90, 1
      %p94 = scmp.eq.s32.totalorder %s14, 3
      %p95 = scmp.ne.s32.totalorder %s90, %s92
      %p96 = scmp.eq.s32.totalorder %s14, 0
      %p97 = por %p95, %p96
      %p98 = scmp.ne.s32.totalorder %s90, %s92
      %p99 = scmp.eq.s32.totalorder %s19, 3
      %p100 = por %p98, %p99
      %p101 = scmp.ne.s32.totalorder %s92, %s93
      %p102 = scmp.eq.s32.totalorder %s19, 0
      %p103 = por %p101, %p102
      %p104 = scmp.ne.s32.totalorder %s92, %s93
      %p105 = scmp.eq.s32.totalorder %s20, 3
      %p106 = por %p104, %p105
      %p108 = scmp.ne.s32.totalorder %s93, %s107
      %p109 = scmp.eq.s32.totalorder %s20, 0
      %p110 = por %p108, %p109
      %s111 = ssub.s32 %s21, %s33
      %s112 = ssub.s32 %s22, %s29
      %s113 = sor.u32 %s111, %s112
      %p114 = scmp.eq.s32.totalorder %s113, 0
      %s116 = sadd.s32 %s115, 1
      %s117 = scalar_select %p114, %s115, %s116
      %p120 = pneg %p114
      %p121 = scmp.eq.s32.totalorder %s14, 3
      %p122 = por %p120, %p121
      %p123 = scmp.ne.s32.totalorder %s115, %s118
      %p124 = scmp.eq.s32.totalorder %s14, 0
      %p125 = por %p123, %p124
      %p126 = scmp.ne.s32.totalorder %s115, %s118
      %p127 = scmp.eq.s32.totalorder %s19, 3
      %p128 = por %p126, %p127
      %p129 = scmp.ne.s32.totalorder %s118, %s119
      %p130 = scmp.eq.s32.totalorder %s19, 0
      %p131 = por %p129, %p130
      %p132 = scmp.ne.s32.totalorder %s118, %s119
      %p133 = scmp.eq.s32.totalorder %s20, 3
      %p134 = por %p132, %p133
      %p136 = scmp.ne.s32.totalorder %s119, %s135
      %p137 = scmp.eq.s32.totalorder %s20, 0
      %p138 = por %p136, %p137
      %s139 = ssub.s32 %s21, %s33
      %s140 = ssub.s32 %s22, %s29
      %s141 = sor.u32 %s139, %s140
      %p142 = scmp.eq.s32.totalorder %s141, 0
      %s144 = sadd.s32 %s143, 1
      %s145 = scalar_select %p142, %s143, %s144
      %p148 = pneg %p142
      %p149 = scmp.eq.s32.totalorder %s14, 3
      %p150 = por %p148, %p149
      %p151 = scmp.ne.s32.totalorder %s143, %s146
      %p152 = scmp.eq.s32.totalorder %s14, 0
      %p153 = por %p151, %p152
      %p154 = scmp.ne.s32.totalorder %s143, %s146
      %p155 = scmp.eq.s32.totalorder %s19, 3
      %p156 = por %p154, %p155
      %p157 = scmp.ne.s32.totalorder %s146, %s147
      %p158 = scmp.eq.s32.totalorder %s19, 0
      %p159 = por %p157, %p158
      %p160 = scmp.ne.s32.totalorder %s146, %s147
      %p161 = scmp.eq.s32.totalorder %s20, 3
      %p162 = por %p160, %p161
      %p164 = scmp.ne.s32.totalorder %s147, %s163
      %p165 = scmp.eq.s32.totalorder %s20, 0
      %p166 = por %p164, %p165
      %s167 = ssub.s32 %s21, %s33
      %p168 = scmp.eq.s32.totalorder %s167, 0
      %s170 = sadd.s32 %s169, 1
      %s171 = scalar_select %p168, %s169, %s170
      %p174 = pneg %p168
      %p175 = scmp.eq.s32.totalorder %s14, 3
      %p176 = por %p174, %p175
      %p177 = scmp.ne.s32.totalorder %s169, %s172
      %p178 = scmp.eq.s32.totalorder %s14, 0
      %p179 = por %p177, %p178
      %p180 = scmp.ne.s32.totalorder %s169, %s172
      %p181 = scmp.eq.s32.totalorder %s19, 3
      %p182 = por %p180, %p181
      %p183 = scmp.ne.s32.totalorder %s172, %s173
      %p184 = scmp.eq.s32.totalorder %s19, 0
      %p185 = por %p183, %p184
      %p186 = scmp.ne.s32.totalorder %s172, %s173
      %p187 = scmp.eq.s32.totalorder %s20, 3
      %p188 = por %p186, %p187
      %p190 = scmp.ne.s32.totalorder %s173, %s189
      %p191 = scmp.eq.s32.totalorder %s20, 0
      %p192 = por %p190, %p191
      %p193 = scmp.le.s32.totalorder 1, %s14
      %p194 = scmp.lt.s32.totalorder %s14, 5
      %p195 = pnand %p193, %p194
      %p196 = pneg %p195
      // Predicated region
      $region9: #{tpu_custom_call.1} parent=5 // pred_check
        _
      $region10: #{tpu_custom_call.1} parent=5 // pred_check_branch
        %198 = sbr.rel (%p195) target = $region12
      $region11: #{tpu_custom_call.1} parent=5 // pred_region
        %s199 = ssub.s32 %s14, 1
        // Predicated region
        $region13: #{tpu_custom_call.1} parent=11 // pred_check
          %p200 = pneg %p103
        $region14: #{tpu_custom_call.1} parent=11 // pred_check_branch
          %202 = sbr.rel (%p200) target = $region16
        $region15: #{tpu_custom_call.1} parent=11 // pred_region
          _
        $region16: #{tpu_custom_call.1} parent=11 // pred_fallthru
          _
      $region12: #{tpu_custom_call.1} parent=5 // pred_fallthru
        _
      %p203 = scmp.lt.s32.totalorder %s14, 4
      // Predicated region
      $region17: #{tpu_custom_call.1} parent=5 // pred_check
        %p204 = pneg %p203
      $region18: #{tpu_custom_call.1} parent=5 // pred_check_branch
        %206 = sbr.rel (%p204) target = $region20
      $region19: #{tpu_custom_call.1} parent=5 // pred_region
        // Predicated region
        $region21: #{tpu_custom_call.1} parent=19 // pred_check
          %p207 = pneg %p48
        $region22: #{tpu_custom_call.1} parent=19 // pred_check_branch
          %209 = sbr.rel (%p207) target = $region24
        $region23: #{tpu_custom_call.1} parent=19 // pred_region
          %s210 = smul.u32 16, %s22
          %p211 = scmp.lt.s32.totalorder %s21, 1
          %s212 = scalar_select %p211, %s21, 1
          %p213 = scmp.lt.s32.totalorder %s210, 31
          %s214 = scalar_select %p213, %s210, 31
          %s215 = smul.addr %s212, 32
          %s216 = sadd.s32 %s214, %s215
          %s217 = smul.addr %s216, 8
          %s218 = scalar_lea.vmem %s0, %s217
          %s219 = smul.u32 16, %s22
        $region24: #{tpu_custom_call.1} parent=19 // pred_fallthru
          _
        // Predicated region
        $region25: #{tpu_custom_call.1} parent=19 // pred_check
          %p220 = pneg %p76
        $region26: #{tpu_custom_call.1} parent=19 // pred_check_branch
          %222 = sbr.rel (%p220) target = $region28
        $region27: #{tpu_custom_call.1} parent=19 // pred_region
          %p223 = scmp.lt.s32.totalorder %s21, 1
          %s224 = scalar_select %p223, %s21, 1
          %p225 = scmp.lt.s32.totalorder %s22, 1
          %s226 = scalar_select %p225, %s22, 1
          %s227 = smul.addr %s224, 2
          %s228 = sadd.s32 %s226, %s227
          %s229 = smul.addr %s228, 8
          %s230 = scalar_lea.vmem %s1, %s229
        $region28: #{tpu_custom_call.1} parent=19 // pred_fallthru
          _
        // Predicated region
        $region29: #{tpu_custom_call.1} parent=19 // pred_check
          %p231 = pneg %p125
        $region30: #{tpu_custom_call.1} parent=19 // pred_check_branch
          %233 = sbr.rel (%p231) target = $region32
        $region31: #{tpu_custom_call.1} parent=19 // pred_region
          %p234 = scmp.lt.s32.totalorder %s21, 1
          %s235 = scalar_select %p234, %s21, 1
          %p236 = scmp.lt.s32.totalorder %s22, 1
          %s237 = scalar_select %p236, %s22, 1
          %s238 = smul.addr %s235, 2
          %s239 = sadd.s32 %s237, %s238
          %s240 = smul.addr %s239, 4
          %s241 = scalar_lea.vmem %s3, %s240
        $region32: #{tpu_custom_call.1} parent=19 // pred_fallthru
          _
        // Predicated region
        $region33: #{tpu_custom_call.1} parent=19 // pred_check
          %p242 = pneg %p153
        $region34: #{tpu_custom_call.1} parent=19 // pred_check_branch
          %244 = sbr.rel (%p242) target = $region36
        $region35: #{tpu_custom_call.1} parent=19 // pred_region
          %s245 = sand.u32 %s143, 1
          %s246 = sand.u32 %s143, 1
          %s247 = smul.addr %s246, 8
          %s248 = scalar_lea.vmem [#allocation7], %s247
          %s249 = smul.addr %s21, 4
          %s250 = sadd.s32 %s22, %s249
          %s251 = smul.addr %s250, 4
          %s252 = scalar_lea.vmem %s4, %s251
          // Predicated region
          $region37: #{tpu_custom_call.1} parent=35 // pred_check
            _
          $region38: #{tpu_custom_call.1} parent=35 // pred_check_branch
            %254 = sbr.rel (0) target = $region40
          $region39: #{tpu_custom_call.1} parent=35 // pred_region
            // Predicated region
            $region41: #{tpu_custom_call.1} parent=39 // pred_check
              _
            $region42: #{tpu_custom_call.1} parent=39 // pred_check_branch
              %256 = sbr.rel target = $region44
            $region43: #{tpu_custom_call.1} parent=39 // pred_region
              // Predicated region
              $region56: #{tpu_custom_call.1} parent=43 // pred_check
                _
              $region57: #{tpu_custom_call.1} parent=43 // pred_check_branch
                %274 = sbr.rel (0) target = $region59
              $region58: #{tpu_custom_call.1} parent=43 // pred_region
                loop: start=0, step=1, limit=1
                $region60: #{tpu_custom_call.1} parent=58 // loop_pre_header
                  _
                $region61: #{tpu_custom_call.1} parent=58 // loop_header
                  %s276 = sphi 0, %s280
                  %p277 = scmp.ge.s32.totalorder %s276, 1
                  %s281 = sphi %s252, %s252
                  %s282 = sphi %s248, %s248
                $region62: #{tpu_custom_call.1} parent=58 // loop_header_branch
                  %279 = sbr.rel (%p277) target = $region66
                $region63: #{tpu_custom_call.1} parent=58 // loop_body
                  _
                $region64: #{tpu_custom_call.1} parent=58 // loop_footer
                  %s280 = sadd.s32 1, %s276
                $region65: #{tpu_custom_call.1} parent=58 // loop_footer_branch
                  %275 = sbr.rel target = $region61
                $region66: #{tpu_custom_call.1} parent=58 // loop_exit
                  _
                %s284 = ssub.s32 16, 1
                loop: start=0, step=1, limit=1
                $region67: #{tpu_custom_call.1} parent=58 // loop_pre_header
                  _
                $region68: #{tpu_custom_call.1} parent=58 // loop_header
                  %s286 = sphi 0, %s290
                  %p287 = scmp.ge.s32.totalorder %s286, 1
                  %s291 = sphi %s252, %s252
                  %s292 = sphi %s248, %s248
                $region69: #{tpu_custom_call.1} parent=58 // loop_header_branch
                  %289 = sbr.rel (%p287) target = $region73
                $region70: #{tpu_custom_call.1} parent=58 // loop_body
                  %v293 = vld [vmem:[%s291] sm:%s284]
                  %294 = vst [vmem:[%s292] sm:%s284] %v293
                  %v295 = vld [vmem:[%s291 + $0x8] sm:%s284]
                  %296 = vst [vmem:[%s292 + $0x4] sm:%s284] %v295
                $region71: #{tpu_custom_call.1} parent=58 // loop_footer
                  %s290 = sadd.s32 1, %s286
                $region72: #{tpu_custom_call.1} parent=58 // loop_footer_branch
                  %285 = sbr.rel target = $region68
                $region73: #{tpu_custom_call.1} parent=58 // loop_exit
                  _
              $region59: #{tpu_custom_call.1} parent=43 // pred_fallthru
                _
            $region44: #{tpu_custom_call.1} parent=39 // pred_fallthru
              _
            // Predicated region
            $region45: #{tpu_custom_call.1} parent=39 // pred_check
              _
            $region46: #{tpu_custom_call.1} parent=39 // pred_check_branch
              %258 = sbr.rel (0) target = $region48
            $region47: #{tpu_custom_call.1} parent=39 // pred_region
              %s260 = ssub.s32 16, 1
              loop: start=0, step=1, limit=1
              $region49: #{tpu_custom_call.1} parent=47 // loop_pre_header
                _
              $region50: #{tpu_custom_call.1} parent=47 // loop_header
                %s262 = sphi 0, %s266
                %p263 = scmp.ge.s32.totalorder %s262, 1
                %s267 = sphi %s252, %s252
                %s268 = sphi %s248, %s248
              $region51: #{tpu_custom_call.1} parent=47 // loop_header_branch
                %265 = sbr.rel (%p263) target = $region55
              $region52: #{tpu_custom_call.1} parent=47 // loop_body
                %v269 = vld [vmem:[%s267] sm:%s260]
                %270 = vst [vmem:[%s268] sm:%s260] %v269
                %v271 = vld [vmem:[%s267 + $0x8] sm:%s260]
                %272 = vst [vmem:[%s268 + $0x4] sm:%s260] %v271
              $region53: #{tpu_custom_call.1} parent=47 // loop_footer
                %s266 = sadd.s32 1, %s262
              $region54: #{tpu_custom_call.1} parent=47 // loop_footer_branch
                %261 = sbr.rel target = $region50
              $region55: #{tpu_custom_call.1} parent=47 // loop_exit
                _
            $region48: #{tpu_custom_call.1} parent=39 // pred_fallthru
              _
          $region40: #{tpu_custom_call.1} parent=35 // pred_fallthru
            _
          %297 = vnop
        $region36: #{tpu_custom_call.1} parent=19 // pred_fallthru
          _
      $region20: #{tpu_custom_call.1} parent=5 // pred_fallthru
        _
      %p298 = scmp.le.s32.totalorder 1, %s14
      %p299 = scmp.lt.s32.totalorder %s14, 5
      %p300 = pnand %p298, %p299
      %p301 = pneg %p300
      // Predicated region
      $region74: #{tpu_custom_call.1} parent=5 // pred_check
        _
      $region75: #{tpu_custom_call.1} parent=5 // pred_check_branch
        %303 = sbr.rel (%p300) target = $region77
      $region76: #{tpu_custom_call.1} parent=5 // pred_region
        %s304 = ssub.s32 %s14, 1
        %s305 = sand.u32 %s146, 1
        %s306 = sand.u32 %s146, 1
        %s307 = smul.addr %s306, 8
        %s308 = scalar_lea.vmem [#allocation7], %s307
        // Predicated region
        $region78: #{tpu_custom_call.1} parent=76 // pred_check
          %p309 = pneg %p159
        $region79: #{tpu_custom_call.1} parent=76 // pred_check_branch
          %311 = sbr.rel (%p309) target = $region81
        $region80: #{tpu_custom_call.1} parent=76 // pred_region
          _
        $region81: #{tpu_custom_call.1} parent=76 // pred_fallthru
          _
        %s312 = smul.u32 16, %s24
        %p313 = scmp.lt.s32.totalorder %s23, 1
        %s314 = scalar_select %p313, %s23, 1
        %p315 = scmp.lt.s32.totalorder %s312, 31
        %s316 = scalar_select %p315, %s312, 31
        %s317 = smul.addr %s314, 32
        %s318 = sadd.s32 %s316, %s317
        %s319 = smul.addr %s318, 8
        %s320 = scalar_lea.vmem %s0, %s319
        %p321 = pneg %p54
        %p322 = pneg %p51
        %p323 = scmp.lt.s32.totalorder %s23, 1
        %s324 = scalar_select %p323, %s23, 1
        %p325 = scmp.lt.s32.totalorder %s24, 1
        %s326 = scalar_select %p325, %s24, 1
        %s327 = smul.addr %s324, 2
        %s328 = sadd.s32 %s326, %s327
        %s329 = smul.addr %s328, 8
        %s330 = scalar_lea.vmem %s1, %s329
        %p331 = pneg %p82
        %p332 = pneg %p79
        %p333 = pneg %p103
        %p334 = pneg %p100
        %p335 = scmp.lt.s32.totalorder %s23, 1
        %s336 = scalar_select %p335, %s23, 1
        %p337 = scmp.lt.s32.totalorder %s24, 1
        %s338 = scalar_select %p337, %s24, 1
        %s339 = smul.addr %s336, 2
        %s340 = sadd.s32 %s338, %s339
        %s341 = smul.addr %s340, 4
        %s342 = scalar_lea.vmem %s3, %s341
        %p343 = pneg %p131
        %p344 = pneg %p128
        %s345 = sand.u32 %s146, 1
        %s346 = sand.u32 %s146, 1
        %s347 = smul.addr %s346, 8
        %s348 = scalar_lea.vmem [#allocation7], %s347
        %p349 = pneg %p159
        %p350 = pneg %p156
        %p351 = pneg %p185
        %p352 = pneg %p182
        %s353 = sand.u32 %s172, 1
        %s354 = scalar_lea.sflag [#allocation9], %s353
        %s355 = sand.u32 %s172, 1
        %s356 = smul.addr %s355, 4
        %s357 = scalar_lea.vmem [#allocation8], %s356
        %s358 = smul.u32 16, %s24
        %p359 = scmp.lt.s32.totalorder %s23, 1
        %s360 = scalar_select %p359, %s23, 1
        %p361 = scmp.lt.s32.totalorder %s358, 31
        %s362 = scalar_select %p361, %s358, 31
        %s363 = smul.addr %s360, 32
        %s364 = sadd.s32 %s362, %s363
        %s365 = smul.addr %s364, 8
        %s366 = scalar_lea.vmem %s0, %s365
        %s367 = smul.u32 16, %s24
        %p368 = scmp.lt.s32.totalorder %s23, 1
        %s369 = scalar_select %p368, %s23, 1
        %p370 = scmp.lt.s32.totalorder %s24, 1
        %s371 = scalar_select %p370, %s24, 1
        %s372 = smul.addr %s369, 2
        %s373 = sadd.s32 %s371, %s372
        %s374 = smul.addr %s373, 8
        %s375 = scalar_lea.vmem %s1, %s374
        %p376 = scmp.lt.s32.totalorder %s23, 1
        %s377 = scalar_select %p376, %s23, 1
        %p378 = scmp.lt.s32.totalorder %s24, 1
        %s379 = scalar_select %p378, %s24, 1
        %s380 = smul.addr %s377, 2
        %s381 = sadd.s32 %s379, %s380
        %s382 = smul.addr %s381, 4
        %s383 = scalar_lea.vmem %s3, %s382
        %p384 = scmp.eq.s32.totalorder %s24, 0
        // Predicated region
        $region82: #{tpu_custom_call.1} parent=76 // pred_check
          %p385 = pneg %p384
        $region83: #{tpu_custom_call.1} parent=76 // pred_check_branch
          %387 = sbr.rel (%p385) target = $region85
        $region84: #{tpu_custom_call.1} parent=76 // pred_region
          %vm388 = vcmask 3072
          %389 = vst.msk [vmem:[#allocation2] sm:$0xf] %vm388, -inf
          %390 = vst.msk [vmem:[#allocation4] sm:$0xf] %vm388, -inf
          %vm391 = vcmask 60416
          %392 = vst.msk [vmem:[#allocation3] sm:$0xf] %vm391, 0.0
          %393 = vst.msk [vmem:[#allocation5] sm:$0xf] %vm391, 0.0
          %394 = vst.msk [vmem:[#allocation6] sm:$0xf] %vm388, 0.0
        $region85: #{tpu_custom_call.1} parent=76 // pred_fallthru
          _
        %v395 = vld [vmem:[%s366] sm:$0xff]
        %v396 = vld [vmem:[%s366 + $0x8] sm:$0xff]
        %v397 = vld [vmem:[%s366 + $0x10] sm:$0xff]
        %v398 = vld [vmem:[%s366 + $0x18] sm:$0xff]
        %v399 = vld [vmem:[%s366 + $0x20] sm:$0xff]
        %v400 = vld [vmem:[%s366 + $0x28] sm:$0xff]
        %v401 = vld [vmem:[%s366 + $0x30] sm:$0xff]
        %v402 = vld [vmem:[%s366 + $0x38] sm:$0xff]
        %v403 = vld [vmem:[%s366 + $0x40] sm:$0xff]
        %v404 = vld [vmem:[%s366 + $0x48] sm:$0xff]
        %v405 = vld [vmem:[%s366 + $0x50] sm:$0xff]
        %v406 = vld [vmem:[%s366 + $0x58] sm:$0xff]
        %v407 = vld [vmem:[%s366 + $0x60] sm:$0xff]
        %v408 = vld [vmem:[%s366 + $0x68] sm:$0xff]
        %v409 = vld [vmem:[%s366 + $0x70] sm:$0xff]
        %v410 = vld [vmem:[%s366 + $0x78] sm:$0xff]
        %v411 = vld [vmem:[%s375] sm:$0xff]
        %v412 = vld [vmem:[%s2] sm:$0x7]
        %414 = vset.pattern.permute.xlu0 0
        %415 = vperm.xlu0 %414, %v412
        %v416 = vpop.permute.xlu0 %415
        %v418 = vlaneseq
        %v419 = vshrl.u32 %v418, 7
        %v420 = vsub.s32 0, %v419
        %v421 = vrot.slane %v411, %v420
        %v422 = vmul.f32 %v416, %v421
        %423 = vset.pattern.permute.xlu0 1
        %424 = vperm.xlu0 %423, %v412
        %v425 = vpop.permute.xlu0 %424
        %v427 = vlaneseq
        %v428 = vshrl.u32 %v427, 7
        %v429 = vsub.s32 1, %v428
        %v430 = vrot.slane %v411, %v429
        %v431 = vmul.f32 %v425, %v430
        %v432 = vadd.f32 %v422, %v431
        %433 = vset.pattern.permute.xlu0 2
        %434 = vperm.xlu0 %433, %v412
        %v435 = vpop.permute.xlu0 %434
        %v437 = vlaneseq
        %v438 = vshrl.u32 %v437, 7
        %v439 = vsub.s32 2, %v438
        %v440 = vrot.slane %v411, %v439
        %v441 = vmul.f32 %v435, %v440
        %v442 = vadd.f32 %v432, %v441
        %443 = vset.pattern.permute.xlu0 3
        %444 = vperm.xlu0 %443, %v412
        %v445 = vpop.permute.xlu0 %444
        %v447 = vlaneseq
        %v448 = vshrl.u32 %v447, 7
        %v449 = vsub.s32 3, %v448
        %v450 = vrot.slane %v411, %v449
        %v451 = vmul.f32 %v445, %v450
        %v452 = vadd.f32 %v442, %v451
        %453 = vset.pattern.permute.xlu0 4
        %454 = vperm.xlu0 %453, %v412
        %v455 = vpop.permute.xlu0 %454
        %v457 = vlaneseq
        %v458 = vshrl.u32 %v457, 7
        %v459 = vsub.s32 4, %v458
        %v460 = vrot.slane %v411, %v459
        %v461 = vmul.f32 %v455, %v460
        %v462 = vadd.f32 %v452, %v461
        %463 = vset.pattern.permute.xlu0 5
        %464 = vperm.xlu0 %463, %v412
        %v465 = vpop.permute.xlu0 %464
        %v467 = vlaneseq
        %v468 = vshrl.u32 %v467, 7
        %v469 = vsub.s32 5, %v468
        %v470 = vrot.slane %v411, %v469
        %v471 = vmul.f32 %v465, %v470
        %v472 = vadd.f32 %v462, %v471
        %473 = vset.pattern.permute.xlu0 6
        %474 = vperm.xlu0 %473, %v412
        %v475 = vpop.permute.xlu0 %474
        %v477 = vlaneseq
        %v478 = vshrl.u32 %v477, 7
        %v479 = vsub.s32 6, %v478
        %v480 = vrot.slane %v411, %v479
        %v481 = vmul.f32 %v475, %v480
        %v482 = vadd.f32 %v472, %v481
        %483 = vset.pattern.permute.xlu0 7
        %484 = vperm.xlu0 %483, %v412
        %v485 = vpop.permute.xlu0 %484
        %v487 = vlaneseq
        %v488 = vshrl.u32 %v487, 7
        %v489 = vsub.s32 7, %v488
        %v490 = vrot.slane %v411, %v489
        %v491 = vmul.f32 %v485, %v490
        %v492 = vadd.f32 %v482, %v491
        %v493 = vld [vmem:[%s383] sm:$0xf]
        %v494 = vld [vmem:[%s308] sm:$0xf]
        %v495 = vld [vmem:[%s308 + $0x4] sm:$0xf]
        %v496 = vlaneseq
        %v497 = vshrl.u32 %v496, 7
        %v498 = vsub.s32 0, %v497
        %v499 = vrot.slane %v492, %v498
        %v500 = vadd.f32 %v499, %v493
        %v501 = vlaneseq
        %v502 = vshrl.u32 %v501, 7
        %v503 = vsub.s32 1, %v502
        %v504 = vrot.slane %v492, %v503
        %v505 = vadd.f32 %v504, %v494
        %vm506 = vcmp.le.f32.partialorder %v505, 0.0
        %v507 = vmax.f32 %v505, 0.0
        %v508 = vlaneseq
        %v509 = vshrl.u32 %v508, 7
        %v510 = vsub.s32 2, %v509
        %v511 = vrot.slane %v492, %v510
        %v512 = vadd.f32 %v511, %v495
        %vm513 = vcmp.le.f32.partialorder %v512, 0.0
        %v514 = vmax.f32 %v512, 0.0
        %vm515 = vmand %vm506, %vm513
        %v516 = vadd.f32 %v507, %v514
        %v517 = vsel %vm515, %v500, -inf
        %v518 = vsub.f32 0.0, %v516
        %v519 = vlaneseq
        %v520 = vand.u32 %v519, 127
        %vm521 = vcmask 1043456
        %v522 = vsel %vm521, %v517, -inf
        %523 = vmax.xlane.f32.xlu0 %v522
        %v524 = vpop.xlane.xlu0 %523
        %vm525 = vcmp.eq.f32.partialorder %v517, %v524
        %v526 = vsel %vm525, %v520, 128
        %v527 = vsel %vm521, %v526, 2147483647
        %v528 = vand.u32 %v527, 65535
        %v529 = vshra.s32 %v527, 16
        %v530 = vcvt.s32.f32 %v528
        %v531 = vcvt.s32.f32 %v529
        %532 = vmin.xlane.f32.xlu0 %v531
        %v533 = vpop.xlane.xlu0 %532
        %vm534 = vcmp.eq.f32.partialorder %v531, %v533
        %v535 = vsel %vm534, %v530, inf
        %536 = vmin.xlane.f32.xlu0 %v535
        %v537 = vpop.xlane.xlu0 %536
        %v538 = vcvt.f32.s32 %v537
        %v539 = vcvt.f32.s32 %v533
        %v540 = vshll.u32 %v539, 16
        %v541 = vadd.s32 %v540, %v538
        %vm542 = vcmp.eq.s32.totalorder %v520, %v541
        %v543 = vsel %vm542, 1, 0
        %v544 = vcvt.s32.f32 %v543
        %545 = vmatprep.subr.mxu0 0.0
        %546 = vmatpush1.msra.mxu0 %v410
        %547 = vmatprep.subr.mxu0 0.0
        %548 = vmatpush1.msra.mxu0 %v409
        %549 = vmatprep.subr.mxu0 0.0
        %550 = vmatpush1.msra.mxu0 %v408
        %551 = vmatprep.subr.mxu0 0.0
        %552 = vmatpush1.msra.mxu0 %v407
        %553 = vmatprep.subr.mxu0 0.0
        %554 = vmatpush1.msra.mxu0 %v406
        %555 = vmatprep.subr.mxu0 0.0
        %556 = vmatpush1.msra.mxu0 %v405
        %557 = vmatprep.subr.mxu0 0.0
        %558 = vmatpush1.msra.mxu0 %v404
        %559 = vmatprep.subr.mxu0 0.0
        %560 = vmatpush1.msra.mxu0 %v403
        %561 = vmatprep.subr.mxu0 0.0
        %562 = vmatpush1.msra.mxu0 %v402
        %563 = vmatprep.subr.mxu0 0.0
        %564 = vmatpush1.msra.mxu0 %v401
        %565 = vmatprep.subr.mxu0 0.0
        %566 = vmatpush1.msra.mxu0 %v400
        %567 = vmatprep.subr.mxu0 0.0
        %568 = vmatpush1.msra.mxu0 %v399
        %569 = vmatprep.subr.mxu0 0.0
        %570 = vmatpush1.msra.mxu0 %v398
        %571 = vmatprep.subr.mxu0 0.0
        %572 = vmatpush1.msra.mxu0 %v397
        %573 = vmatprep.subr.mxu0 0.0
        %574 = vmatpush1.msra.mxu0 %v396
        %575 = vmatprep.subr.mxu0 0.0
        %576 = vmatpush1.msra.mxu0 %v395
        %577 = vmatprep.subr.mxu0 0.0
        %578 = vmatpush2.msra.mxu0 0.0
        %579 = vmatprep.subr.mxu0 0.0
        %580 = vmatpush2.msra.mxu0 0.0
        %581 = vmatprep.subr.mxu0 0.0
        %582 = vmatpush2.msra.mxu0 0.0
        %583 = vmatprep.subr.mxu0 0.0
        %584 = vmatpush2.msra.mxu0 0.0
        %585 = vmatprep.subr.mxu0 0.0
        %586 = vmatpush2.msra.mxu0 0.0
        %587 = vmatprep.subr.mxu0 0.0
        %588 = vmatpush2.msra.mxu0 0.0
        %589 = vmatprep.subr.mxu0 0.0
        %590 = vmatpush2.msra.mxu0 0.0
        %591 = vmatprep.subr.mxu0 0.0
        %592 = vmatpush2.msra.mxu0 0.0
        %593 = vmatprep.subr.mxu0 0.0
        %594 = vmatpush2.msra.mxu0 0.0
        %595 = vmatprep.subr.mxu0 0.0
        %596 = vmatpush2.msra.mxu0 0.0
        %597 = vmatprep.subr.mxu0 0.0
        %598 = vmatpush2.msra.mxu0 0.0
        %599 = vmatprep.subr.mxu0 0.0
        %600 = vmatpush2.msra.mxu0 0.0
        %601 = vmatprep.subr.mxu0 0.0
        %602 = vmatpush2.msra.mxu0 0.0
        %603 = vmatprep.subr.mxu0 0.0
        %604 = vmatpush2.msra.mxu0 0.0
        %605 = vmatprep.subr.mxu0 0.0
        %606 = vmatpush2.msra.mxu0 0.0
        %607 = vmatprep.subr.mxu0 0.0
        %608 = vmatpush2.msra.mxu0 0.0
        %609 = vmatprep.mubr.f32.mxu0 0.0
        %610 = vmatmul.mubr.f32.gmra.mxu0 %v544
        %v611 = vpop.f32.mrf.mxu0
        %v612 = vadd.f32 0.0, %v611
        %v613 = vpop.f32.mrf.mxu0
        %614 = vdwg.mxu0
        %v615 = vsel %vm521, %v518, -inf
        %616 = vmax.xlane.f32.xlu0 %v615
        %v617 = vpop.xlane.xlu0 %616
        %vm618 = vcmp.eq.f32.partialorder %v518, %v617
        %v619 = vsel %vm618, %v520, 128
        %v620 = vsel %vm521, %v619, 2147483647
        %v621 = vand.u32 %v620, 65535
        %v622 = vshra.s32 %v620, 16
        %v623 = vcvt.s32.f32 %v621
        %v624 = vcvt.s32.f32 %v622
        %625 = vmin.xlane.f32.xlu0 %v624
        %v626 = vpop.xlane.xlu0 %625
        %vm627 = vcmp.eq.f32.partialorder %v624, %v626
        %v628 = vsel %vm627, %v623, inf
        %629 = vmin.xlane.f32.xlu0 %v628
        %v630 = vpop.xlane.xlu0 %629
        %v631 = vcvt.f32.s32 %v630
        %v632 = vcvt.f32.s32 %v626
        %v633 = vshll.u32 %v632, 16
        %v634 = vadd.s32 %v633, %v631
        %vm635 = vcmp.eq.s32.totalorder %v520, %v634
        %v636 = vsel %vm635, 1, 0
        %v637 = vcvt.s32.f32 %v636
        %638 = vmatprep.subr.mxu0 0.0
        %639 = vmatpush1.msra.mxu0 %v410
        %640 = vmatprep.subr.mxu0 0.0
        %641 = vmatpush1.msra.mxu0 %v409
        %642 = vmatprep.subr.mxu0 0.0
        %643 = vmatpush1.msra.mxu0 %v408
        %644 = vmatprep.subr.mxu0 0.0
        %645 = vmatpush1.msra.mxu0 %v407
        %646 = vmatprep.subr.mxu0 0.0
        %647 = vmatpush1.msra.mxu0 %v406
        %648 = vmatprep.subr.mxu0 0.0
        %649 = vmatpush1.msra.mxu0 %v405
        %650 = vmatprep.subr.mxu0 0.0
        %651 = vmatpush1.msra.mxu0 %v404
        %652 = vmatprep.subr.mxu0 0.0
        %653 = vmatpush1.msra.mxu0 %v403
        %654 = vmatprep.subr.mxu0 0.0
        %655 = vmatpush1.msra.mxu0 %v402
        %656 = vmatprep.subr.mxu0 0.0
        %657 = vmatpush1.msra.mxu0 %v401
        %658 = vmatprep.subr.mxu0 0.0
        %659 = vmatpush1.msra.mxu0 %v400
        %660 = vmatprep.subr.mxu0 0.0
        %661 = vmatpush1.msra.mxu0 %v399
        %662 = vmatprep.subr.mxu0 0.0
        %663 = vmatpush1.msra.mxu0 %v398
        %664 = vmatprep.subr.mxu0 0.0
        %665 = vmatpush1.msra.mxu0 %v397
        %666 = vmatprep.subr.mxu0 0.0
        %667 = vmatpush1.msra.mxu0 %v396
        %668 = vmatprep.subr.mxu0 0.0
        %669 = vmatpush1.msra.mxu0 %v395
        %670 = vmatprep.subr.mxu0 0.0
        %671 = vmatpush2.msra.mxu0 0.0
        %672 = vmatprep.subr.mxu0 0.0
        %673 = vmatpush2.msra.mxu0 0.0
        %674 = vmatprep.subr.mxu0 0.0
        %675 = vmatpush2.msra.mxu0 0.0
        %676 = vmatprep.subr.mxu0 0.0
        %677 = vmatpush2.msra.mxu0 0.0
        %678 = vmatprep.subr.mxu0 0.0
        %679 = vmatpush2.msra.mxu0 0.0
        %680 = vmatprep.subr.mxu0 0.0
        %681 = vmatpush2.msra.mxu0 0.0
        %682 = vmatprep.subr.mxu0 0.0
        %683 = vmatpush2.msra.mxu0 0.0
        %684 = vmatprep.subr.mxu0 0.0
        %685 = vmatpush2.msra.mxu0 0.0
        %686 = vmatprep.subr.mxu0 0.0
        %687 = vmatpush2.msra.mxu0 0.0
        %688 = vmatprep.subr.mxu0 0.0
        %689 = vmatpush2.msra.mxu0 0.0
        %690 = vmatprep.subr.mxu0 0.0
        %691 = vmatpush2.msra.mxu0 0.0
        %692 = vmatprep.subr.mxu0 0.0
        %693 = vmatpush2.msra.mxu0 0.0
        %694 = vmatprep.subr.mxu0 0.0
        %695 = vmatpush2.msra.mxu0 0.0
        %696 = vmatprep.subr.mxu0 0.0
        %697 = vmatpush2.msra.mxu0 0.0
        %698 = vmatprep.subr.mxu0 0.0
        %699 = vmatpush2.msra.mxu0 0.0
        %700 = vmatprep.subr.mxu0 0.0
        %701 = vmatpush2.msra.mxu0 0.0
        %702 = vmatprep.mubr.f32.mxu0 0.0
        %703 = vmatmul.mubr.f32.gmra.mxu0 %v637
        %v704 = vpop.f32.mrf.mxu0
        %v705 = vadd.f32 0.0, %v704
        %v706 = vpop.f32.mrf.mxu0
        %707 = vdwg.mxu0
        %v708 = vld [vmem:[#allocation2] sm:$0xf]
        %vm709 = vcmp.gt.f32.partialorder %v524, %v708
        %v710 = vsel %vm709, %v524, %v708
        %vm711 = vcmask 3072
        %712 = vst.msk [vmem:[#allocation2] sm:$0xf] %vm711, %v710
        %v713 = vld [vmem:[#allocation3] sm:$0xf]
        %v714 = vsel %vm709, 1, 0
        %715 = vset.pattern.permute.xlu0 0
        %716 = vperm.xlu0 %715, %v714
        %v717 = vpop.permute.xlu0 %716
        %vm718 = vcmp.eq.s32.totalorder %v717, 1
        %v719 = vsel %vm718, %v612, %v713
        %vm720 = vcmask 60416
        %721 = vst.msk [vmem:[#allocation3] sm:$0xf] %vm720, %v719
        %v722 = vld [vmem:[#allocation4] sm:$0xf]
        %vm723 = vcmp.gt.f32.partialorder %v617, %v722
        %v724 = vsel %vm723, %v617, %v722
        %725 = vst.msk [vmem:[#allocation4] sm:$0xf] %vm711, %v724
        %v726 = vld [vmem:[#allocation5] sm:$0xf]
        %v727 = vsel %vm723, 1, 0
        %728 = vset.pattern.permute.xlu0 0
        %729 = vperm.xlu0 %728, %v727
        %v730 = vpop.permute.xlu0 %729
        %vm731 = vcmp.eq.s32.totalorder %v730, 1
        %v732 = vsel %vm731, %v705, %v726
        %733 = vst.msk [vmem:[#allocation5] sm:$0xf] %vm720, %v732
        %v734 = vld [vmem:[#allocation6] sm:$0xf]
        %vm735 = vcmp.gt.f32.partialorder %v524, -inf
        %v736 = vsel %vm735, 1, 0
        %v737 = vcvt.s32.f32 %v736
        %v738 = vmax.f32 %v734, %v737
        %739 = vst.msk [vmem:[#allocation6] sm:$0xf] %vm711, %v738
        %p740 = scmp.eq.s32.totalorder %s24, 1
        // Predicated region
        $region86: #{tpu_custom_call.1} parent=76 // pred_check
          %p741 = pneg %p740
        $region87: #{tpu_custom_call.1} parent=76 // pred_check_branch
          %743 = sbr.rel (%p741) target = $region89
        $region88: #{tpu_custom_call.1} parent=76 // pred_region
          %v744 = vld [vmem:[#allocation6] sm:$0xf]
          %vm745 = vcmp.gt.f32.partialorder %v744, 0.0
          %v746 = vld [vmem:[#allocation3] sm:$0xf]
          %v747 = vld [vmem:[#allocation5] sm:$0xf]
          %v748 = vsel %vm745, 1, 0
          %749 = vset.pattern.permute.xlu0 0
          %750 = vperm.xlu0 %749, %v748
          %v751 = vpop.permute.xlu0 %750
          %vm752 = vcmp.eq.s32.totalorder %v751, 1
          %v753 = vsel %vm752, %v746, %v747
          %754 = vst.msk [vmem:[%s357] sm:$0xf] %vm720, %v753
        $region89: #{tpu_custom_call.1} parent=76 // pred_fallthru
          _
        %s755 = sand.u32 %s172, 1
        %s756 = scalar_lea.sflag [#allocation9], %s755
        %s757 = sand.u32 %s172, 1
        %s758 = smul.addr %s757, 4
        %s759 = scalar_lea.vmem [#allocation8], %s758
        // Predicated region
        $region90: #{tpu_custom_call.1} parent=76 // pred_check
          %p760 = pneg %p182
        $region91: #{tpu_custom_call.1} parent=76 // pred_check_branch
          %762 = sbr.rel (%p760) target = $region93
        $region92: #{tpu_custom_call.1} parent=76 // pred_region
          %s764 = ssub.s32 64, 64
          %765 = vsyncadd %s756, %s764
          %s766 = smul.addr %s23, 64
          %s767 = scalar_lea.hbm %s5, %s766
          %s769 = sshll.u32 %s759, 4
          %s770 = int_to_ptr.vmem [resolvable:$true] %s769
          %772 = dma.vmem_to_hbm [thread:$0]  %s770, 64, %s767, %s756
        $region93: #{tpu_custom_call.1} parent=76 // pred_fallthru
          _
      $region77: #{tpu_custom_call.1} parent=5 // pred_fallthru
        _
      %p773 = scmp.le.s32.totalorder 2, %s14
      // Predicated region
      $region94: #{tpu_custom_call.1} parent=5 // pred_check
        %p774 = pneg %p773
      $region95: #{tpu_custom_call.1} parent=5 // pred_check_branch
        %776 = sbr.rel (%p774) target = $region97
      $region96: #{tpu_custom_call.1} parent=5 // pred_region
        %s777 = ssub.s32 %s14, 2
        // Predicated region
        $region98: #{tpu_custom_call.1} parent=96 // pred_check
          %p778 = pneg %p188
        $region99: #{tpu_custom_call.1} parent=96 // pred_check_branch
          %780 = sbr.rel (%p778) target = $region101
        $region100: #{tpu_custom_call.1} parent=96 // pred_region
          %s781 = sand.u32 %s173, 1
          %s782 = scalar_lea.sflag [#allocation9], %s781
          %s783 = sand.u32 %s173, 1
          %s784 = smul.addr %s783, 4
          %s785 = scalar_lea.vmem [#allocation8], %s784
          %786 = dma.done %s782, 64
        $region101: #{tpu_custom_call.1} parent=96 // pred_fallthru
          _
      $region97: #{tpu_custom_call.1} parent=5 // pred_fallthru
        _
    $region6: #{tpu_custom_call.1} parent=1 // loop_footer
      %s18 = sadd.s32 1, %s14
    $region7: #{tpu_custom_call.1} parent=1 // loop_footer_branch
      %13 = sbr.rel target = $region3
    $region8: #{tpu_custom_call.1} parent=1 // loop_exit
      _
    %787 = vsyncpa [#allocation9], 1
    %s788 = scalar_lea.sflag [#allocation9], 1
    %789 = vsyncpa %s788, 1

</llo_original>
